<compile_context>
chip_gen: v5e
topology: v5e:2x2
jax: 0.10.0
libtpu: 0.0.40
codegen_flags: <defaults>
</compile_context>

<pallas_src>
import functools

import jax
import jax.numpy as jnp
from jax.experimental import pallas as pl
from jax.experimental.pallas import tpu as pltpu


# ----------------------------- Pallas kernel --------------------------------

def _fused_film_conv_kernel(p_ref, w_ref, film_ref, o_ref, *, fuse_type):
    """All four FiLM-conv branches in one MXU matmul.

    p_ref    : (B, T, Kp)   im2col patches, all 4 branches stacked along K and
                            zero-padded to Kp (bf16)
    w_ref    : (Kp, 4F)     block-diagonal conv weights (bf16)
    film_ref : (B, 2, 4F)   packed FiLM {gamma, beta} (conv bias folded), f32
    o_ref    : (B, T, 2F)   fuse_type='add' : lanes = [static | gripper]
               (B, T, 4F)   fuse_type='cat' : lanes = [rs | ps | rg | pg]
    """
    B, T, Kp = p_ref.shape
    Np = w_ref.shape[-1]

    # One MXU matmul covers all four branches (K = Kp = 128, N = 4F = 128).
    y = jnp.dot(p_ref[...].reshape(B * T, Kp), w_ref[...],
                preferred_element_type=jnp.float32)            # (B*T, 4F) f32
    y = y.reshape(B, T, Np)

    gamma = film_ref[:, 0:1, :]                                # (B, 1, 4F)
    beta = film_ref[:, 1:2, :]
    y = jnp.maximum(y * gamma + beta, 0.0)

    if fuse_type == "add":
        # Branch lane order is [rs | rg | ps | pg]; the rgb+pc fuse is a single
        # half-vreg-split add (XLU lane rotate) -> lanes [static | gripper].
        half = Np // 2
        o_ref[...] = y[:, :, :half] + y[:, :, half:]
    else:
        # Branch lane order already matches the torch.cat order
        # [rs | ps | rg | pg]; one fully lane-dense (128-wide) store.
        o_ref[...] = y


# ------------------------------ pallas_call glue ----------------------------

def _round_up(x, m):
    return ((x + m - 1) // m) * m


def _pick_hw_tile(hw, batch, max_rows=4096):
    """Largest divisor of `hw` that is a multiple of 8 while keeping the
    per-step patch block around batch*tile <= max_rows rows (bounds VMEM when
    the problem scales; v7x has half the VMEM of v5e/v6e)."""
    cap = max(8, max_rows // max(batch, 1))
    if hw <= cap:
        return hw
    for t in range(min(cap, hw), 7, -1):
        if hw % t == 0 and t % 8 == 0:
            return t
    return hw  # no suitable divisor; fall back to a single block


def fused_conv_local(patches, weights, film, feat, fuse_type):
    """patches: (B, HW, Kp) bf16; weights: (Kp, 4F) bf16; film: (B, 2, 4F) f32.

    Returns the lane-dense kernel output: (B, HW, 2F) for 'add' or
    (B, HW, 4F) for 'cat'.
    """
    B, HW, Kp = patches.shape
    Np = weights.shape[-1]
    assert Np == 4 * feat
    n_out = 2 * feat if fuse_type == "add" else 4 * feat

    tile_hw = _pick_hw_tile(HW, B)
    grid = (HW // tile_hw,)

    kernel = functools.partial(_fused_film_conv_kernel, fuse_type=fuse_type)

    flops = 2 * B * HW * Kp * Np
    bytes_accessed = int(patches.size) * patches.dtype.itemsize \
        + int(weights.size) * weights.dtype.itemsize \
        + int(film.size) * film.dtype.itemsize \
        + B * HW * n_out * 4

    return pl.pallas_call(
        kernel,
        out_shape=jax.ShapeDtypeStruct((B, HW, n_out), jnp.float32),
        grid=grid,
        in_specs=[
            pl.BlockSpec((B, tile_hw, Kp), lambda h: (0, h, 0)),
            pl.BlockSpec((Kp, Np), lambda h: (0, 0)),
            pl.BlockSpec((B, 2, Np), lambda h: (0, 0, 0)),
        ],
        out_specs=pl.BlockSpec((B, tile_hw, n_out), lambda h: (0, h, 0)),
        # HW tiles are independent; "parallel" lets v7x shard large-HW problems
        # across its two TensorCores.  At these sizes grid == (1,), i.e. zero
        # serial grid overhead on single-TC v5e/v6e (per perf review).
        compiler_params=pltpu.CompilerParams(
            dimension_semantics=("parallel",)),
        cost_estimate=pl.CostEstimate(
            flops=flops, transcendentals=0, bytes_accessed=int(bytes_accessed)),
    )(patches, weights, film)


# --------------------------------- im2col -----------------------------------

def _im2col(x_nchw, k=3):
    """NCHW image -> patch tokens [B, H*W, k*k*C] (SAME padding, stride 1).

    Only the *raw* image (tiny) is transposed; the 9x-inflated patch tensor is
    built feature-last directly, so no big HBM relayout precedes the kernel.
    Feature order is (kh, kw, C); the conv weights below use the same order.
    # TODO(synk): if real PyTorch (F, C, kh, kw) weights are ever loaded, they
    # must be permuted to (kh, kw, C) order before flattening.
    """
    B, C, H, W = x_nchw.shape
    x = jnp.transpose(x_nchw, (0, 2, 3, 1))                      # (B, H, W, C)
    pad = k // 2
    xp = jnp.pad(x, ((0, 0), (pad, pad), (pad, pad), (0, 0)))
    cols = []
    for dh in range(k):
        for dw in range(k):
            cols.append(xp[:, dh:dh + H, dw:dw + W, :])          # (B, H, W, C)
    p = jnp.concatenate(cols, axis=-1)                           # (B, H, W, k*k*C)
    return p.reshape(B, H * W, k * k * C)


# --------------------------- module (params + fwd) ---------------------------

class FiLMConvLocalParams:
    """One FiLM-conditioned conv branch: conv3x3(C_in->F) + FiLM(lang) + ReLU."""

    def __init__(self, key, c_in, feat, lang_dim, k=3):
        k1, k2 = jax.random.split(key, 2)
        ckk = c_in * k * k
        self.w_conv = jax.random.normal(k1, (ckk, feat), jnp.float32) / jnp.sqrt(ckk)
        self.b_conv = jnp.zeros((feat,), jnp.float32)
        self.w_film = jax.random.normal(k2, (lang_dim, 2 * feat), jnp.float32) / jnp.sqrt(lang_dim)
        # init FiLM to ~identity: gamma around 1, beta around 0
        self.b_film = jnp.concatenate([jnp.ones((feat,)), jnp.zeros((feat,))]).astype(jnp.float32)
        self.k = k
        self.feat = feat
        self.ckk = ckk

    def film_params(self, lang):
        gb = lang @ self.w_film + self.b_film          # (B, 2F)
        gamma, beta = jnp.split(gb, 2, axis=-1)
        beta = gamma * self.b_conv[None, :] + beta     # fold conv bias into beta
        return gamma, beta                             # each (B, F)


class Conv_pc_rgb_local:
    def __init__(self, key, fuse_type="add", c_rgb=3, c_pc=3, feat=32, lang_dim=32):
        ks = jax.random.split(key, 4)
        self.pc_static = FiLMConvLocalParams(ks[0], c_pc, feat, lang_dim)
        self.pc_gripper = FiLMConvLocalParams(ks[1], c_pc, feat, lang_dim)
        self.rgb_static = FiLMConvLocalParams(ks[2], c_rgb, feat, lang_dim)
        self.rgb_gripper = FiLMConvLocalParams(ks[3], c_rgb, feat, lang_dim)
        self.fuse_type = fuse_type
        self.feat = feat

        # Branch order along the fused K / N axes (decides which lane block each
        # branch's features land in):
        #   'add': [rs, rg, ps, pg] -> the rgb+pc add in-kernel is a single
        #          half-vreg split; result lanes = [static | gripper].
        #   'cat': [rs, ps, rg, pg] -> already the torch.cat order, so the
        #          kernel stores the 128-lane matmul result directly.
        if fuse_type == "add":
            self._order = ["rgb_static", "rgb_gripper", "pc_static", "pc_gripper"]
        elif fuse_type == "cat":
            self._order = ["rgb_static", "pc_static", "rgb_gripper", "pc_gripper"]
        else:
            raise ValueError(fuse_type)
        self._branches = [getattr(self, n) for n in self._order]

        # Fused block-diagonal conv weight: K zero-padded to a multiple of 128
        # (removes sub-lane tail handling on the MXU contraction), N = 4F = 128.
        k_total = sum(b.ckk for b in self._branches)
        self.k_pad = _round_up(k_total, 128)
        n_total = 4 * feat
        w = jnp.zeros((self.k_pad, n_total), jnp.float32)
        ko = 0
        for i, b in enumerate(self._branches):
            w = w.at[ko:ko + b.ckk, i * feat:(i + 1) * feat].set(b.w_conv)
            ko += b.ckk
        self.w_fused = w.astype(jnp.bfloat16)                     # (Kp, 4F)

    def __call__(self, x):
        lang = x["latent_goal"]
        F = self.feat

        pats, gammas, betas = [], [], []
        B = HW = None
        for name, b in zip(self._order, self._branches):
            p = _im2col(x[name], b.k)                    # (B, HW, ckk) f32
            B, HW, _ = p.shape
            pats.append(p)
            g, be = b.film_params(lang)                  # (B, F) each, bias folded
            gammas.append(g)
            betas.append(be)

        patches = jnp.concatenate(pats, axis=-1)         # (B, HW, sum ckk)
        k_tot = patches.shape[-1]
        if k_tot < self.k_pad:
            patches = jnp.pad(patches, ((0, 0), (0, 0), (0, self.k_pad - k_tot)))
        patches = patches.astype(jnp.bfloat16)           # (B, HW, Kp)
        # TODO(synk): pc patches are cast to bf16 for the MXU; keep them f32 (or
        # normalize pc coordinates) if point-cloud magnitudes make bf16 lossy.

        film = jnp.stack([jnp.concatenate(gammas, axis=-1),
                          jnp.concatenate(betas, axis=-1)], axis=1)   # (B, 2, 4F)

        out = fused_conv_local(patches, self.w_fused, film, F, self.fuse_type)

        # Cheap final relayout in XLA (lane-dense kernel output -> module layout).
        if self.fuse_type == "add":
            # (B, HW, 2F) -> (B, 2, HW, F)   [static, gripper]
            return out.reshape(B, HW, 2, F).transpose(0, 2, 1, 3)
        # (B, HW, 4F) -> (B, 4*HW, F)        [rs, ps, rg, pg]
        out = out.reshape(B, HW, 4, F).transpose(0, 2, 1, 3)
        return out.reshape(B, 4 * HW, F)


# ---------------------------- pure-JAX reference -----------------------------

def _reference_forward(model, x):
    lang = x["latent_goal"]

    def branch(params, img):
        p = _im2col(img, params.k)                                    # f32
        y = jnp.einsum("bhc,cf->bhf", p, params.w_conv) + params.b_conv
        gb = lang @ params.w_film + params.b_film
        gamma, beta = jnp.split(gb, 2, axis=-1)
        return jnp.maximum(gamma[:, None, :] * y + beta[:, None, :], 0.0)

    rs = branch(model.rgb_static, x["rgb_static"])
    ps = branch(model.pc_static, x["pc_static"])
    rg = branch(model.rgb_gripper, x["rgb_gripper"])
    pg = branch(model.pc_gripper, x["pc_gripper"])
    if model.fuse_type == "add":
        return jnp.stack([rs + ps, rg + pg], axis=1)
    return jnp.concatenate([rs, ps, rg, pg], axis=1)


# ----------------------------------- main ------------------------------------

if __name__ == "__main__":
    key = jax.random.PRNGKey(0)
    kp, k1, k2, k3, k4, k5 = jax.random.split(key, 6)

    B, C, H, W = 2, 3, 16, 16
    LANG = 32
    FEAT = 32

    x = {
        "rgb_static": jax.random.normal(k1, (B, C, H, W), jnp.float32),
        "rgb_gripper": jax.random.normal(k2, (B, C, H, W), jnp.float32),
        "pc_static": jax.random.normal(k3, (B, C, H, W), jnp.float32),
        "pc_gripper": jax.random.normal(k4, (B, C, H, W), jnp.float32),
        "latent_goal": jax.random.normal(k5, (B, LANG), jnp.float32),
    }

    # fuse_type='add'
    model_add = Conv_pc_rgb_local(kp, fuse_type="add", c_rgb=C, c_pc=C,
                                  feat=FEAT, lang_dim=LANG)
    out_add = jax.block_until_ready(model_add(x))
    assert out_add.shape == (B, 2, H * W, FEAT), out_add.shape
    ref_add = _reference_forward(model_add, x)
    err_add = float(jnp.max(jnp.abs(out_add - ref_add)))
    assert err_add < 0.3, f"add-path max abs err {err_add}"

    # fuse_type='cat'
    model_cat = Conv_pc_rgb_local(kp, fuse_type="cat", c_rgb=C, c_pc=C,
                                  feat=FEAT, lang_dim=LANG)
    out_cat = jax.block_until_ready(model_cat(x))
    assert out_cat.shape == (B, 4 * H * W, FEAT), out_cat.shape
    ref_cat = _reference_forward(model_cat, x)
    err_cat = float(jnp.max(jnp.abs(out_cat - ref_cat)))
    assert err_cat < 0.3, f"cat-path max abs err {err_cat}"

    print("KERNEL_OK")
</pallas_src>

<mosaic_0001>
module attributes {stable_mosaic.version = 11 : i64} {
  func.func @_fused_film_conv_kernel(%arg0: i32, %arg1: memref<2x256x128xbf16, #tpu.memory_space<vmem>>, %arg2: memref<128x128xbf16, #tpu.memory_space<vmem>>, %arg3: memref<2x2x128xf32, #tpu.memory_space<vmem>>, %arg4: memref<2x256x64xf32, #tpu.memory_space<vmem>>) attributes {dimension_semantics = [#tpu.dimension_semantics<parallel>], iteration_bounds = array<i64: 1>, scalar_prefetch = 0 : i64, scratch_operands = 0 : i64, tpu.core_type = #tpu.core_type<tc>, window_params = [{transform_indices = @transform_0, window_bounds = array<i64: 2, 256, 128>}, {pipeline_mode = #tpu.pipeline_mode<synchronous>, transform_indices = @transform_1, window_bounds = array<i64: 128, 128>}, {pipeline_mode = #tpu.pipeline_mode<synchronous>, transform_indices = @transform_2, window_bounds = array<i64: 2, 2, 128>}, {transform_indices = @transform_3, window_bounds = array<i64: 2, 256, 64>}]} {
    %c0 = arith.constant 0 : index
    %c0_0 = arith.constant 0 : index
    %c0_1 = arith.constant 0 : index
    %0 = vector.load %arg1[%c0, %c0_0, %c0_1] : memref<2x256x128xbf16, #tpu.memory_space<vmem>>, vector<2x256x128xbf16>
    %1 = vector.shape_cast %0 : vector<2x256x128xbf16> to vector<512x128xbf16>
    %c0_2 = arith.constant 0 : index
    %c0_3 = arith.constant 0 : index
    %2 = vector.load %arg2[%c0_2, %c0_3] : memref<128x128xbf16, #tpu.memory_space<vmem>>, vector<128x128xbf16>
    %cst = arith.constant dense<0.000000e+00> : vector<512x128xf32>
    %3 = tpu.matmul %1, %2, %cst {dimension_numbers = #tpu.dot_dimension_numbers<[1], [0], [0], [1], [0, 0, 1, 1], [], []>} : vector<512x128xbf16>, vector<128x128xbf16>, vector<512x128xf32> -> vector<512x128xf32>
    %4 = vector.shape_cast %3 : vector<512x128xf32> to vector<2x256x128xf32>
    %c0_4 = arith.constant 0 : index
    %c0_5 = arith.constant 0 : index
    %c0_6 = arith.constant 0 : index
    %5 = vector.load %arg3[%c0_4, %c0_5, %c0_6] : memref<2x2x128xf32, #tpu.memory_space<vmem>>, vector<2x1x128xf32>
    %c0_7 = arith.constant 0 : index
    %c1 = arith.constant 1 : index
    %c0_8 = arith.constant 0 : index
    %6 = vector.load %arg3[%c0_7, %c1, %c0_8] : memref<2x2x128xf32, #tpu.memory_space<vmem>>, vector<2x1x128xf32>
    %7 = vector.broadcast %5 : vector<2x1x128xf32> to vector<2x256x128xf32>
    %8 = arith.mulf %4, %7 : vector<2x256x128xf32>
    %9 = vector.broadcast %6 : vector<2x1x128xf32> to vector<2x256x128xf32>
    %10 = arith.addf %8, %9 : vector<2x256x128xf32>
    %cst_9 = arith.constant 0.000000e+00 : f32
    %11 = vector.broadcast %cst_9 : f32 to vector<2x256x128xf32>
    %12 = arith.maximumf %10, %11 : vector<2x256x128xf32>
    %13 = vector.extract_strided_slice %12 {offsets = [0, 0, 0], sizes = [2, 256, 64], strides = [1, 1, 1]} : vector<2x256x128xf32> to vector<2x256x64xf32>
    %14 = vector.extract_strided_slice %12 {offsets = [0, 0, 64], sizes = [2, 256, 64], strides = [1, 1, 1]} : vector<2x256x128xf32> to vector<2x256x64xf32>
    %15 = arith.addf %13, %14 : vector<2x256x64xf32>
    %c0_10 = arith.constant 0 : index
    %c0_11 = arith.constant 0 : index
    %c0_12 = arith.constant 0 : index
    %16 = vector.load %arg4[%c0_10, %c0_11, %c0_12] : memref<2x256x64xf32, #tpu.memory_space<vmem>>, vector<2x256x64xf32>
    tpu.vector_store %arg4[%c0_10, %c0_11, %c0_12], %15 {strides = array<i32>} : memref<2x256x64xf32, #tpu.memory_space<vmem>>, vector<2x256x64xf32>,
    return
  }
  func.func @transform_0(%arg0: i32) -> (i32, i32, i32) {
    %c0_i32 = arith.constant 0 : i32
    %c0_i32_0 = arith.constant 0 : i32
    %c0_i32_1 = arith.constant 0 : i32
    return %c0_i32, %arg0, %c0_i32_0 : i32, i32, i32
  }
  func.func @transform_1(%arg0: i32) -> (i32, i32) {
    %c0_i32 = arith.constant 0 : i32
    %c0_i32_0 = arith.constant 0 : i32
    %c0_i32_1 = arith.constant 0 : i32
    return %c0_i32, %c0_i32_0 : i32, i32
  }
  func.func @transform_2(%arg0: i32) -> (i32, i32, i32) {
    %c0_i32 = arith.constant 0 : i32
    %c0_i32_0 = arith.constant 0 : i32
    %c0_i32_1 = arith.constant 0 : i32
    %c0_i32_2 = arith.constant 0 : i32
    return %c0_i32, %c0_i32_0, %c0_i32_1 : i32, i32, i32
  }
  func.func @transform_3(%arg0: i32) -> (i32, i32, i32) {
    %c0_i32 = arith.constant 0 : i32
    %c0_i32_0 = arith.constant 0 : i32
    %c0_i32_1 = arith.constant 0 : i32
    return %c0_i32, %arg0, %c0_i32_0 : i32, i32, i32
  }
}

</mosaic_0001>

<llo_original>
// kernel: tpu_custom_call.1
$region0: #{tpu_custom_call.1}
  #allocation0 [shape = 'u32[]', space=smem, size = 0x4, offset = 0x4, fixed_abs, tag = 'smem constant byte address 0x4 - core index']
  #allocation1 [shape = 'u32[72,128]{1,0:T(1,128)}', space=vmem, size = 0x9000, scoped, tag = 'internal scratch']
  %s0 = inlined_call_operand.hbm [shape: bf16[2,256,128], index: 0, kind: input, shape index: {}]
  %s1 = inlined_call_operand.hbm [shape: bf16[128,128], index: 1, kind: input, shape index: {}]
  %s2 = inlined_call_operand.hbm [shape: f32[2,2,128], index: 2, kind: input, shape index: {}]
  %s3 = inlined_call_operand.vmem [shape: f32[2,256,64], index: 3, kind: output, shape index: {}]
  %s4 = sld [smem:[#allocation0]]
  $region34: #{tpu_custom_call.1} parent=0
    _
  %s6 = ssub.s32 1, %s4
  %s7 = scalar_select 0, %s6, %s4
  $region1: #{tpu_custom_call.1} parent=0
    #allocation2 [shape = 'u8[131072]{0}', space=vmem, size = 0x20000, scoped, tag = 'input window, operand 0, single buffered']
    #allocation3 [shape = 's32[1]{0}', space=sflag, size = 0x4, scoped, tag = 'scoped memory for tpu_custom_call.1']
    #allocation4 [shape = 'u8[32768]{0}', space=vmem, size = 0x8000, scoped, tag = 'input window, operand 1, single buffered']
    #allocation5 [shape = 's32[1]{0}', space=sflag, size = 0x4, scoped, tag = 'scoped memory for tpu_custom_call.1']
    #allocation6 [shape = 'u8[2048]{0}', space=vmem, size = 0x800, scoped, tag = 'input window, operand 2, single buffered']
    %8 = vsyncpa [#allocation3], 0
    %9 = vsyncpa [#allocation5], 0
    // Predicated region
    $region2: #{tpu_custom_call.1} parent=1 // pred_check
      _
    $region3: #{tpu_custom_call.1} parent=1 // pred_check_branch
      %11 = sbr.rel (0) target = $region5
    $region4: #{tpu_custom_call.1} parent=1 // pred_region
      %13 = vsyncadd [#allocation3], 0
      %s14 = sshll.u32 %s0, 4
      %s15 = int_to_ptr.hbm [resolvable:$true] %s14
      %s16 = sshll.u32 [#allocation2], 4
      %s17 = int_to_ptr.vmem [resolvable:$true] %s16
      %22 = dma.hbm_to_vmem [thread:$0]  %s15, 4096, %s17, [#allocation3], 64, 64, 4
    $region5: #{tpu_custom_call.1} parent=1 // pred_fallthru
      _
    // Predicated region
    $region6: #{tpu_custom_call.1} parent=1 // pred_check
      _
    $region7: #{tpu_custom_call.1} parent=1 // pred_check_branch
      %24 = sbr.rel (0) target = $region9
    $region8: #{tpu_custom_call.1} parent=1 // pred_region
      %26 = vsyncadd [#allocation5], 0
      %s27 = sshll.u32 %s1, 4
      %s28 = int_to_ptr.hbm [resolvable:$true] %s27
      %s29 = sshll.u32 [#allocation4], 4
      %s30 = int_to_ptr.vmem [resolvable:$true] %s29
      %35 = dma.hbm_to_vmem [thread:$0]  %s28, 1024, %s30, [#allocation5], 64, 64, 4
    $region9: #{tpu_custom_call.1} parent=1 // pred_fallthru
      _
    // Predicated region
    $region10: #{tpu_custom_call.1} parent=1 // pred_check
      _
    $region11: #{tpu_custom_call.1} parent=1 // pred_check_branch
      %37 = sbr.rel (0) target = $region13
    $region12: #{tpu_custom_call.1} parent=1 // pred_region
      %39 = vsyncadd [#allocation5], 0
      %s40 = sshll.u32 %s2, 4
      %s41 = int_to_ptr.hbm [resolvable:$true] %s40
      %s42 = sshll.u32 [#allocation6], 4
      %s43 = int_to_ptr.vmem [resolvable:$true] %s42
      %48 = dma.hbm_to_vmem [thread:$0]  %s41, 64, %s43, [#allocation5], 32, 32, 2
    $region13: #{tpu_custom_call.1} parent=1 // pred_fallthru
      _
    // Predicated region
    $region14: #{tpu_custom_call.1} parent=1 // pred_check
      _
    $region15: #{tpu_custom_call.1} parent=1 // pred_check_branch
      %50 = sbr.rel (0) target = $region17
    $region16: #{tpu_custom_call.1} parent=1 // pred_region
      %52 = dma.done [#allocation3], 4096
    $region17: #{tpu_custom_call.1} parent=1 // pred_fallthru
      _
    // Predicated region
    $region18: #{tpu_custom_call.1} parent=1 // pred_check
      _
    $region19: #{tpu_custom_call.1} parent=1 // pred_check_branch
      %54 = sbr.rel (0) target = $region21
    $region20: #{tpu_custom_call.1} parent=1 // pred_region
      %56 = dma.done [#allocation5], 1024
    $region21: #{tpu_custom_call.1} parent=1 // pred_fallthru
      _
    // Predicated region
    $region22: #{tpu_custom_call.1} parent=1 // pred_check
      _
    $region23: #{tpu_custom_call.1} parent=1 // pred_check_branch
      %58 = sbr.rel (0) target = $region25
    $region24: #{tpu_custom_call.1} parent=1 // pred_region
      %60 = dma.done [#allocation5], 64
    $region25: #{tpu_custom_call.1} parent=1 // pred_fallthru
      _
    %v61 = vld [vmem:[#allocation2] sm:$0xf]
    %v62 = vld [vmem:[#allocation2 + $0x4] sm:$0xf]
    %v63 = vld [vmem:[#allocation2 + $0x8] sm:$0xf]
    %v64 = vld [vmem:[#allocation2 + $0xc] sm:$0xf]
    %v65 = vld [vmem:[#allocation2 + $0x10] sm:$0xf]
    %v66 = vld [vmem:[#allocation2 + $0x14] sm:$0xf]
    %v67 = vld [vmem:[#allocation2 + $0x18] sm:$0xf]
    %v68 = vld [vmem:[#allocation2 + $0x1c] sm:$0xf]
    %v69 = vld [vmem:[#allocation2 + $0x20] sm:$0xf]
    %v70 = vld [vmem:[#allocation2 + $0x24] sm:$0xf]
    %v71 = vld [vmem:[#allocation2 + $0x28] sm:$0xf]
    %v72 = vld [vmem:[#allocation2 + $0x2c] sm:$0xf]
    %v73 = vld [vmem:[#allocation2 + $0x30] sm:$0xf]
    %v74 = vld [vmem:[#allocation2 + $0x34] sm:$0xf]
    %v75 = vld [vmem:[#allocation2 + $0x38] sm:$0xf]
    %v76 = vld [vmem:[#allocation2 + $0x3c] sm:$0xf]
    %v77 = vld [vmem:[#allocation2 + $0x40] sm:$0xf]
    %v78 = vld [vmem:[#allocation2 + $0x44] sm:$0xf]
    %v79 = vld [vmem:[#allocation2 + $0x48] sm:$0xf]
    %v80 = vld [vmem:[#allocation2 + $0x4c] sm:$0xf]
    %v81 = vld [vmem:[#allocation2 + $0x50] sm:$0xf]
    %v82 = vld [vmem:[#allocation2 + $0x54] sm:$0xf]
    %v83 = vld [vmem:[#allocation2 + $0x58] sm:$0xf]
    %v84 = vld [vmem:[#allocation2 + $0x5c] sm:$0xf]
    %v85 = vld [vmem:[#allocation2 + $0x60] sm:$0xf]
    %v86 = vld [vmem:[#allocation2 + $0x64] sm:$0xf]
    %v87 = vld [vmem:[#allocation2 + $0x68] sm:$0xf]
    %v88 = vld [vmem:[#allocation2 + $0x6c] sm:$0xf]
    %v89 = vld [vmem:[#allocation2 + $0x70] sm:$0xf]
    %v90 = vld [vmem:[#allocation2 + $0x74] sm:$0xf]
    %v91 = vld [vmem:[#allocation2 + $0x78] sm:$0xf]
    %v92 = vld [vmem:[#allocation2 + $0x7c] sm:$0xf]
    %v93 = vld [vmem:[#allocation2 + $0x80] sm:$0xf]
    %v94 = vld [vmem:[#allocation2 + $0x84] sm:$0xf]
    %v95 = vld [vmem:[#allocation2 + $0x88] sm:$0xf]
    %v96 = vld [vmem:[#allocation2 + $0x8c] sm:$0xf]
    %v97 = vld [vmem:[#allocation2 + $0x90] sm:$0xf]
    %v98 = vld [vmem:[#allocation2 + $0x94] sm:$0xf]
    %v99 = vld [vmem:[#allocation2 + $0x98] sm:$0xf]
    %v100 = vld [vmem:[#allocation2 + $0x9c] sm:$0xf]
    %v101 = vld [vmem:[#allocation2 + $0xa0] sm:$0xf]
    %v102 = vld [vmem:[#allocation2 + $0xa4] sm:$0xf]
    %v103 = vld [vmem:[#allocation2 + $0xa8] sm:$0xf]
    %v104 = vld [vmem:[#allocation2 + $0xac] sm:$0xf]
    %v105 = vld [vmem:[#allocation2 + $0xb0] sm:$0xf]
    %v106 = vld [vmem:[#allocation2 + $0xb4] sm:$0xf]
    %v107 = vld [vmem:[#allocation2 + $0xb8] sm:$0xf]
    %v108 = vld [vmem:[#allocation2 + $0xbc] sm:$0xf]
    %v109 = vld [vmem:[#allocation2 + $0xc0] sm:$0xf]
    %v110 = vld [vmem:[#allocation2 + $0xc4] sm:$0xf]
    %v111 = vld [vmem:[#allocation2 + $0xc8] sm:$0xf]
    %v112 = vld [vmem:[#allocation2 + $0xcc] sm:$0xf]
    %v113 = vld [vmem:[#allocation2 + $0xd0] sm:$0xf]
    %v114 = vld [vmem:[#allocation2 + $0xd4] sm:$0xf]
    %v115 = vld [vmem:[#allocation2 + $0xd8] sm:$0xf]
    %v116 = vld [vmem:[#allocation2 + $0xdc] sm:$0xf]
    %v117 = vld [vmem:[#allocation2 + $0xe0] sm:$0xf]
    %v118 = vld [vmem:[#allocation2 + $0xe4] sm:$0xf]
    %v119 = vld [vmem:[#allocation2 + $0xe8] sm:$0xf]
    %v120 = vld [vmem:[#allocation2 + $0xec] sm:$0xf]
    %v121 = vld [vmem:[#allocation2 + $0xf0] sm:$0xf]
    %v122 = vld [vmem:[#allocation2 + $0xf4] sm:$0xf]
    %v123 = vld [vmem:[#allocation2 + $0xf8] sm:$0xf]
    %v124 = vld [vmem:[#allocation2 + $0xfc] sm:$0xf]
    %v125 = vld [vmem:[#allocation4] sm:$0xf]
    %v126 = vld [vmem:[#allocation4 + $0x4] sm:$0xf]
    %v127 = vld [vmem:[#allocation4 + $0x8] sm:$0xf]
    %v128 = vld [vmem:[#allocation4 + $0xc] sm:$0xf]
    %v129 = vld [vmem:[#allocation4 + $0x10] sm:$0xf]
    %v130 = vld [vmem:[#allocation4 + $0x14] sm:$0xf]
    %v131 = vld [vmem:[#allocation4 + $0x18] sm:$0xf]
    %v132 = vld [vmem:[#allocation4 + $0x1c] sm:$0xf]
    %v133 = vld [vmem:[#allocation4 + $0x20] sm:$0xf]
    %v134 = vld [vmem:[#allocation4 + $0x24] sm:$0xf]
    %v135 = vld [vmem:[#allocation4 + $0x28] sm:$0xf]
    %v136 = vld [vmem:[#allocation4 + $0x2c] sm:$0xf]
    %v137 = vld [vmem:[#allocation4 + $0x30] sm:$0xf]
    %v138 = vld [vmem:[#allocation4 + $0x34] sm:$0xf]
    %v139 = vld [vmem:[#allocation4 + $0x38] sm:$0xf]
    %v140 = vld [vmem:[#allocation4 + $0x3c] sm:$0xf]
    %v205 = vunpack.c.l.b16 %v61
    %v206 = vunpack.c.l.b16 %v62
    %v207 = vunpack.c.l.b16 %v63
    %v208 = vunpack.c.l.b16 %v64
    %v209 = vunpack.c.l.b16 %v65
    %v210 = vunpack.c.l.b16 %v66
    %v211 = vunpack.c.l.b16 %v67
    %v212 = vunpack.c.l.b16 %v68
    %v213 = vunpack.c.l.b16 %v69
    %v214 = vunpack.c.l.b16 %v70
    %v215 = vunpack.c.l.b16 %v71
    %v216 = vunpack.c.l.b16 %v72
    %v217 = vunpack.c.l.b16 %v73
    %v218 = vunpack.c.l.b16 %v74
    %v219 = vunpack.c.l.b16 %v75
    %v220 = vunpack.c.l.b16 %v76
    %v221 = vunpack.c.l.b16 %v77
    %v222 = vunpack.c.l.b16 %v78
    %v223 = vunpack.c.l.b16 %v79
    %v224 = vunpack.c.l.b16 %v80
    %v225 = vunpack.c.l.b16 %v81
    %v226 = vunpack.c.l.b16 %v82
    %v227 = vunpack.c.l.b16 %v83
    %v228 = vunpack.c.l.b16 %v84
    %v229 = vunpack.c.l.b16 %v85
    %v230 = vunpack.c.l.b16 %v86
    %v231 = vunpack.c.l.b16 %v87
    %v232 = vunpack.c.l.b16 %v88
    %v233 = vunpack.c.l.b16 %v89
    %v234 = vunpack.c.l.b16 %v90
    %v235 = vunpack.c.l.b16 %v91
    %v236 = vunpack.c.l.b16 %v92
    %v237 = vunpack.c.l.b16 %v93
    %v238 = vunpack.c.l.b16 %v94
    %v239 = vunpack.c.l.b16 %v95
    %v240 = vunpack.c.l.b16 %v96
    %v241 = vunpack.c.l.b16 %v97
    %v242 = vunpack.c.l.b16 %v98
    %v243 = vunpack.c.l.b16 %v99
    %v244 = vunpack.c.l.b16 %v100
    %v245 = vunpack.c.l.b16 %v101
    %v246 = vunpack.c.l.b16 %v102
    %v247 = vunpack.c.l.b16 %v103
    %v248 = vunpack.c.l.b16 %v104
    %v249 = vunpack.c.l.b16 %v105
    %v250 = vunpack.c.l.b16 %v106
    %v251 = vunpack.c.l.b16 %v107
    %v252 = vunpack.c.l.b16 %v108
    %v253 = vunpack.c.l.b16 %v109
    %v254 = vunpack.c.l.b16 %v110
    %v255 = vunpack.c.l.b16 %v111
    %v256 = vunpack.c.l.b16 %v112
    %v257 = vunpack.c.l.b16 %v113
    %v258 = vunpack.c.l.b16 %v114
    %v259 = vunpack.c.l.b16 %v115
    %v260 = vunpack.c.l.b16 %v116
    %v261 = vunpack.c.l.b16 %v117
    %v262 = vunpack.c.l.b16 %v118
    %v263 = vunpack.c.l.b16 %v119
    %v264 = vunpack.c.l.b16 %v120
    %v265 = vunpack.c.l.b16 %v121
    %v266 = vunpack.c.l.b16 %v122
    %v267 = vunpack.c.l.b16 %v123
    %v268 = vunpack.c.l.b16 %v124
    %v269 = vpack.c.b16 %v206, %v205
    %v270 = vpack.c.b16 %v208, %v207
    %v271 = vpack.c.b16 %v210, %v209
    %v272 = vpack.c.b16 %v212, %v211
    %v273 = vpack.c.b16 %v214, %v213
    %v274 = vpack.c.b16 %v216, %v215
    %v275 = vpack.c.b16 %v218, %v217
    %v276 = vpack.c.b16 %v220, %v219
    %v277 = vpack.c.b16 %v222, %v221
    %v278 = vpack.c.b16 %v224, %v223
    %v279 = vpack.c.b16 %v226, %v225
    %v280 = vpack.c.b16 %v228, %v227
    %v281 = vpack.c.b16 %v230, %v229
    %v282 = vpack.c.b16 %v232, %v231
    %v283 = vpack.c.b16 %v234, %v233
    %v284 = vpack.c.b16 %v236, %v235
    %v285 = vpack.c.b16 %v238, %v237
    %v286 = vpack.c.b16 %v240, %v239
    %v287 = vpack.c.b16 %v242, %v241
    %v288 = vpack.c.b16 %v244, %v243
    %v289 = vpack.c.b16 %v246, %v245
    %v290 = vpack.c.b16 %v248, %v247
    %v291 = vpack.c.b16 %v250, %v249
    %v292 = vpack.c.b16 %v252, %v251
    %v293 = vpack.c.b16 %v254, %v253
    %v294 = vpack.c.b16 %v256, %v255
    %v295 = vpack.c.b16 %v258, %v257
    %v296 = vpack.c.b16 %v260, %v259
    %v297 = vpack.c.b16 %v262, %v261
    %v298 = vpack.c.b16 %v264, %v263
    %v299 = vpack.c.b16 %v266, %v265
    %v300 = vpack.c.b16 %v268, %v267
    %v349 = vunpack.c.l.b16 %v125
    %v350 = vunpack.c.l.b16 %v126
    %v351 = vunpack.c.l.b16 %v127
    %v352 = vunpack.c.l.b16 %v128
    %v353 = vunpack.c.l.b16 %v129
    %v354 = vunpack.c.l.b16 %v130
    %v355 = vunpack.c.l.b16 %v131
    %v356 = vunpack.c.l.b16 %v132
    %v357 = vunpack.c.l.b16 %v133
    %v358 = vunpack.c.l.b16 %v134
    %v359 = vunpack.c.l.b16 %v135
    %v360 = vunpack.c.l.b16 %v136
    %v361 = vunpack.c.l.b16 %v137
    %v362 = vunpack.c.l.b16 %v138
    %v363 = vunpack.c.l.b16 %v139
    %v364 = vunpack.c.l.b16 %v140
    %v365 = vpack.c.b16 %v350, %v349
    %v366 = vpack.c.b16 %v352, %v351
    %v367 = vpack.c.b16 %v354, %v353
    %v368 = vpack.c.b16 %v356, %v355
    %v369 = vpack.c.b16 %v358, %v357
    %v370 = vpack.c.b16 %v360, %v359
    %v371 = vpack.c.b16 %v362, %v361
    %v372 = vpack.c.b16 %v364, %v363
    %381 = vmatpush.bf16.msra.mxu0 %v372
    %382 = vmatpush.bf16.msra.mxu0 %v371
    %383 = vmatpush.bf16.msra.mxu0 %v370
    %384 = vmatpush.bf16.msra.mxu0 %v369
    %385 = vmatpush.bf16.msra.mxu0 %v368
    %386 = vmatpush.bf16.msra.mxu0 %v367
    %387 = vmatpush.bf16.msra.mxu0 %v366
    %388 = vmatpush.bf16.msra.mxu0 %v365
    %389 = vmatmul.bf16.gmra.mxu0 %v269
    %v390 = vpop.f32.mrf.mxu0
    %v391 = vadd.f32 0.0, %v390
    %v392 = vpop.f32.mrf.mxu0
    %v393 = vadd.f32 0.0, %v392
    %394 = vmatmul.bf16.gmra.mxu0 %v270
    %v395 = vpop.f32.mrf.mxu0
    %v396 = vadd.f32 0.0, %v395
    %v397 = vpop.f32.mrf.mxu0
    %v398 = vadd.f32 0.0, %v397
    %399 = vmatmul.bf16.gmra.mxu0 %v271
    %v400 = vpop.f32.mrf.mxu0
    %v401 = vadd.f32 0.0, %v400
    %v402 = vpop.f32.mrf.mxu0
    %v403 = vadd.f32 0.0, %v402
    %404 = vmatmul.bf16.gmra.mxu0 %v272
    %v405 = vpop.f32.mrf.mxu0
    %v406 = vadd.f32 0.0, %v405
    %v407 = vpop.f32.mrf.mxu0
    %v408 = vadd.f32 0.0, %v407
    %409 = vmatmul.bf16.gmra.mxu0 %v273
    %v410 = vpop.f32.mrf.mxu0
    %v411 = vadd.f32 0.0, %v410
    %v412 = vpop.f32.mrf.mxu0
    %v413 = vadd.f32 0.0, %v412
    %414 = vmatmul.bf16.gmra.mxu0 %v274
    %v415 = vpop.f32.mrf.mxu0
    %v416 = vadd.f32 0.0, %v415
    %v417 = vpop.f32.mrf.mxu0
    %v418 = vadd.f32 0.0, %v417
    %419 = vmatmul.bf16.gmra.mxu0 %v275
    %v420 = vpop.f32.mrf.mxu0
    %v421 = vadd.f32 0.0, %v420
    %v422 = vpop.f32.mrf.mxu0
    %v423 = vadd.f32 0.0, %v422
    %424 = vmatmul.bf16.gmra.mxu0 %v276
    %v425 = vpop.f32.mrf.mxu0
    %v426 = vadd.f32 0.0, %v425
    %v427 = vpop.f32.mrf.mxu0
    %v428 = vadd.f32 0.0, %v427
    %429 = vmatmul.bf16.gmra.mxu0 %v277
    %v430 = vpop.f32.mrf.mxu0
    %v431 = vadd.f32 0.0, %v430
    %v432 = vpop.f32.mrf.mxu0
    %v433 = vadd.f32 0.0, %v432
    %434 = vmatmul.bf16.gmra.mxu0 %v278
    %v435 = vpop.f32.mrf.mxu0
    %v436 = vadd.f32 0.0, %v435
    %v437 = vpop.f32.mrf.mxu0
    %v438 = vadd.f32 0.0, %v437
    %439 = vmatmul.bf16.gmra.mxu0 %v279
    %v440 = vpop.f32.mrf.mxu0
    %v441 = vadd.f32 0.0, %v440
    %v442 = vpop.f32.mrf.mxu0
    %v443 = vadd.f32 0.0, %v442
    %444 = vmatmul.bf16.gmra.mxu0 %v280
    %v445 = vpop.f32.mrf.mxu0
    %v446 = vadd.f32 0.0, %v445
    %v447 = vpop.f32.mrf.mxu0
    %v448 = vadd.f32 0.0, %v447
    %449 = vmatmul.bf16.gmra.mxu0 %v281
    %v450 = vpop.f32.mrf.mxu0
    %v451 = vadd.f32 0.0, %v450
    %v452 = vpop.f32.mrf.mxu0
    %v453 = vadd.f32 0.0, %v452
    %454 = vmatmul.bf16.gmra.mxu0 %v282
    %v455 = vpop.f32.mrf.mxu0
    %v456 = vadd.f32 0.0, %v455
    %v457 = vpop.f32.mrf.mxu0
    %v458 = vadd.f32 0.0, %v457
    %459 = vmatmul.bf16.gmra.mxu0 %v283
    %v460 = vpop.f32.mrf.mxu0
    %v461 = vadd.f32 0.0, %v460
    %v462 = vpop.f32.mrf.mxu0
    %v463 = vadd.f32 0.0, %v462
    %464 = vmatmul.bf16.gmra.mxu0 %v284
    %v465 = vpop.f32.mrf.mxu0
    %v466 = vadd.f32 0.0, %v465
    %v467 = vpop.f32.mrf.mxu0
    %v468 = vadd.f32 0.0, %v467
    %469 = vmatmul.bf16.gmra.mxu0 %v285
    %v470 = vpop.f32.mrf.mxu0
    %v471 = vadd.f32 0.0, %v470
    %v472 = vpop.f32.mrf.mxu0
    %v473 = vadd.f32 0.0, %v472
    %474 = vmatmul.bf16.gmra.mxu0 %v286
    %v475 = vpop.f32.mrf.mxu0
    %v476 = vadd.f32 0.0, %v475
    %v477 = vpop.f32.mrf.mxu0
    %v478 = vadd.f32 0.0, %v477
    %479 = vmatmul.bf16.gmra.mxu0 %v287
    %v480 = vpop.f32.mrf.mxu0
    %v481 = vadd.f32 0.0, %v480
    %v482 = vpop.f32.mrf.mxu0
    %v483 = vadd.f32 0.0, %v482
    %484 = vmatmul.bf16.gmra.mxu0 %v288
    %v485 = vpop.f32.mrf.mxu0
    %v486 = vadd.f32 0.0, %v485
    %v487 = vpop.f32.mrf.mxu0
    %v488 = vadd.f32 0.0, %v487
    %489 = vmatmul.bf16.gmra.mxu0 %v289
    %v490 = vpop.f32.mrf.mxu0
    %v491 = vadd.f32 0.0, %v490
    %v492 = vpop.f32.mrf.mxu0
    %v493 = vadd.f32 0.0, %v492
    %494 = vmatmul.bf16.gmra.mxu0 %v290
    %v495 = vpop.f32.mrf.mxu0
    %v496 = vadd.f32 0.0, %v495
    %v497 = vpop.f32.mrf.mxu0
    %v498 = vadd.f32 0.0, %v497
    %499 = vmatmul.bf16.gmra.mxu0 %v291
    %v500 = vpop.f32.mrf.mxu0
    %v501 = vadd.f32 0.0, %v500
    %v502 = vpop.f32.mrf.mxu0
    %v503 = vadd.f32 0.0, %v502
    %504 = vmatmul.bf16.gmra.mxu0 %v292
    %v505 = vpop.f32.mrf.mxu0
    %v506 = vadd.f32 0.0, %v505
    %v507 = vpop.f32.mrf.mxu0
    %v508 = vadd.f32 0.0, %v507
    %509 = vmatmul.bf16.gmra.mxu0 %v293
    %v510 = vpop.f32.mrf.mxu0
    %v511 = vadd.f32 0.0, %v510
    %v512 = vpop.f32.mrf.mxu0
    %v513 = vadd.f32 0.0, %v512
    %514 = vmatmul.bf16.gmra.mxu0 %v294
    %v515 = vpop.f32.mrf.mxu0
    %v516 = vadd.f32 0.0, %v515
    %v517 = vpop.f32.mrf.mxu0
    %v518 = vadd.f32 0.0, %v517
    %519 = vmatmul.bf16.gmra.mxu0 %v295
    %v520 = vpop.f32.mrf.mxu0
    %v521 = vadd.f32 0.0, %v520
    %v522 = vpop.f32.mrf.mxu0
    %v523 = vadd.f32 0.0, %v522
    %524 = vmatmul.bf16.gmra.mxu0 %v296
    %v525 = vpop.f32.mrf.mxu0
    %v526 = vadd.f32 0.0, %v525
    %v527 = vpop.f32.mrf.mxu0
    %v528 = vadd.f32 0.0, %v527
    %529 = vmatmul.bf16.gmra.mxu0 %v297
    %v530 = vpop.f32.mrf.mxu0
    %v531 = vadd.f32 0.0, %v530
    %v532 = vpop.f32.mrf.mxu0
    %v533 = vadd.f32 0.0, %v532
    %534 = vmatmul.bf16.gmra.mxu0 %v298
    %v535 = vpop.f32.mrf.mxu0
    %v536 = vadd.f32 0.0, %v535
    %v537 = vpop.f32.mrf.mxu0
    %v538 = vadd.f32 0.0, %v537
    %539 = vmatmul.bf16.gmra.mxu0 %v299
    %v540 = vpop.f32.mrf.mxu0
    %v541 = vadd.f32 0.0, %v540
    %v542 = vpop.f32.mrf.mxu0
    %v543 = vadd.f32 0.0, %v542
    %544 = vmatmul.bf16.gmra.mxu0 %v300
    %v545 = vpop.f32.mrf.mxu0
    %v546 = vadd.f32 0.0, %v545
    %v547 = vpop.f32.mrf.mxu0
    %v548 = vadd.f32 0.0, %v547
    %549 = vdwg.mxu0
    %v550 = vld [vmem:[#allocation6] sm:$0x1]
    %v551 = vld [vmem:[#allocation6 + $0x2] sm:$0x1]
    %v552 = vld [vmem:[#allocation6 + $0x1] sm:$0x1]
    %v553 = vld [vmem:[#allocation6 + $0x3] sm:$0x1]
    %v554 = vperm.slane %v550, 0
    %v555 = vperm.slane %v551, 0
    %v556 = vmul.f32 %v391, %v554
    %v557 = vmul.f32 %v393, %v554
    %v558 = vmul.f32 %v396, %v554
    %v559 = vmul.f32 %v398, %v554
    %v560 = vmul.f32 %v401, %v554
    %v561 = vmul.f32 %v403, %v554
    %v562 = vmul.f32 %v406, %v554
    %v563 = vmul.f32 %v408, %v554
    %v564 = vmul.f32 %v411, %v554
    %v565 = vmul.f32 %v413, %v554
    %v566 = vmul.f32 %v416, %v554
    %v567 = vmul.f32 %v418, %v554
    %v568 = vmul.f32 %v421, %v554
    %v569 = vmul.f32 %v423, %v554
    %v570 = vmul.f32 %v426, %v554
    %v571 = vmul.f32 %v428, %v554
    %v572 = vmul.f32 %v431, %v554
    %v573 = vmul.f32 %v433, %v554
    %v574 = vmul.f32 %v436, %v554
    %v575 = vmul.f32 %v438, %v554
    %v576 = vmul.f32 %v441, %v554
    %v577 = vmul.f32 %v443, %v554
    %v578 = vmul.f32 %v446, %v554
    %v579 = vmul.f32 %v448, %v554
    %v580 = vmul.f32 %v451, %v554
    %v581 = vmul.f32 %v453, %v554
    %v582 = vmul.f32 %v456, %v554
    %v583 = vmul.f32 %v458, %v554
    %v584 = vmul.f32 %v461, %v554
    %v585 = vmul.f32 %v463, %v554
    %v586 = vmul.f32 %v466, %v554
    %v587 = vmul.f32 %v468, %v554
    %v588 = vmul.f32 %v471, %v555
    %v589 = vmul.f32 %v473, %v555
    %v590 = vmul.f32 %v476, %v555
    %v591 = vmul.f32 %v478, %v555
    %v592 = vmul.f32 %v481, %v555
    %v593 = vmul.f32 %v483, %v555
    %v594 = vmul.f32 %v486, %v555
    %v595 = vmul.f32 %v488, %v555
    %v596 = vmul.f32 %v491, %v555
    %v597 = vmul.f32 %v493, %v555
    %v598 = vmul.f32 %v496, %v555
    %v599 = vmul.f32 %v498, %v555
    %v600 = vmul.f32 %v501, %v555
    %v601 = vmul.f32 %v503, %v555
    %v602 = vmul.f32 %v506, %v555
    %v603 = vmul.f32 %v508, %v555
    %v604 = vmul.f32 %v511, %v555
    %v605 = vmul.f32 %v513, %v555
    %v606 = vmul.f32 %v516, %v555
    %v607 = vmul.f32 %v518, %v555
    %v608 = vmul.f32 %v521, %v555
    %v609 = vmul.f32 %v523, %v555
    %v610 = vmul.f32 %v526, %v555
    %v611 = vmul.f32 %v528, %v555
    %v612 = vmul.f32 %v531, %v555
    %v613 = vmul.f32 %v533, %v555
    %v614 = vmul.f32 %v536, %v555
    %v615 = vmul.f32 %v538, %v555
    %v616 = vmul.f32 %v541, %v555
    %v617 = vmul.f32 %v543, %v555
    %v618 = vmul.f32 %v546, %v555
    %v619 = vmul.f32 %v548, %v555
    %v620 = vperm.slane %v552, 0
    %v621 = vperm.slane %v553, 0
    %v622 = vadd.f32 %v556, %v620
    %v623 = vadd.f32 %v557, %v620
    %v624 = vadd.f32 %v558, %v620
    %v625 = vadd.f32 %v559, %v620
    %v626 = vadd.f32 %v560, %v620
    %v627 = vadd.f32 %v561, %v620
    %v628 = vadd.f32 %v562, %v620
    %v629 = vadd.f32 %v563, %v620
    %v630 = vadd.f32 %v564, %v620
    %v631 = vadd.f32 %v565, %v620
    %v632 = vadd.f32 %v566, %v620
    %v633 = vadd.f32 %v567, %v620
    %v634 = vadd.f32 %v568, %v620
    %v635 = vadd.f32 %v569, %v620
    %v636 = vadd.f32 %v570, %v620
    %v637 = vadd.f32 %v571, %v620
    %v638 = vadd.f32 %v572, %v620
    %v639 = vadd.f32 %v573, %v620
    %v640 = vadd.f32 %v574, %v620
    %v641 = vadd.f32 %v575, %v620
    %v642 = vadd.f32 %v576, %v620
    %v643 = vadd.f32 %v577, %v620
    %v644 = vadd.f32 %v578, %v620
    %v645 = vadd.f32 %v579, %v620
    %v646 = vadd.f32 %v580, %v620
    %v647 = vadd.f32 %v581, %v620
    %v648 = vadd.f32 %v582, %v620
    %v649 = vadd.f32 %v583, %v620
    %v650 = vadd.f32 %v584, %v620
    %v651 = vadd.f32 %v585, %v620
    %v652 = vadd.f32 %v586, %v620
    %v653 = vadd.f32 %v587, %v620
    %v654 = vadd.f32 %v588, %v621
    %v655 = vadd.f32 %v589, %v621
    %v656 = vadd.f32 %v590, %v621
    %v657 = vadd.f32 %v591, %v621
    %v658 = vadd.f32 %v592, %v621
    %v659 = vadd.f32 %v593, %v621
    %v660 = vadd.f32 %v594, %v621
    %v661 = vadd.f32 %v595, %v621
    %v662 = vadd.f32 %v596, %v621
    %v663 = vadd.f32 %v597, %v621
    %v664 = vadd.f32 %v598, %v621
    %v665 = vadd.f32 %v599, %v621
    %v666 = vadd.f32 %v600, %v621
    %v667 = vadd.f32 %v601, %v621
    %v668 = vadd.f32 %v602, %v621
    %v669 = vadd.f32 %v603, %v621
    %v670 = vadd.f32 %v604, %v621
    %v671 = vadd.f32 %v605, %v621
    %v672 = vadd.f32 %v606, %v621
    %v673 = vadd.f32 %v607, %v621
    %v674 = vadd.f32 %v608, %v621
    %v675 = vadd.f32 %v609, %v621
    %v676 = vadd.f32 %v610, %v621
    %v677 = vadd.f32 %v611, %v621
    %v678 = vadd.f32 %v612, %v621
    %v679 = vadd.f32 %v613, %v621
    %v680 = vadd.f32 %v614, %v621
    %v681 = vadd.f32 %v615, %v621
    %v682 = vadd.f32 %v616, %v621
    %v683 = vadd.f32 %v617, %v621
    %v684 = vadd.f32 %v618, %v621
    %v685 = vadd.f32 %v619, %v621
    %v686 = vmax.f32 %v622, 0.0
    %v687 = vmax.f32 %v623, 0.0
    %v688 = vmax.f32 %v624, 0.0
    %v689 = vmax.f32 %v625, 0.0
    %v690 = vmax.f32 %v626, 0.0
    %v691 = vmax.f32 %v627, 0.0
    %v692 = vmax.f32 %v628, 0.0
    %v693 = vmax.f32 %v629, 0.0
    %v694 = vmax.f32 %v630, 0.0
    %v695 = vmax.f32 %v631, 0.0
    %v696 = vmax.f32 %v632, 0.0
    %v697 = vmax.f32 %v633, 0.0
    %v698 = vmax.f32 %v634, 0.0
    %v699 = vmax.f32 %v635, 0.0
    %v700 = vmax.f32 %v636, 0.0
    %v701 = vmax.f32 %v637, 0.0
    %v702 = vmax.f32 %v638, 0.0
    %v703 = vmax.f32 %v639, 0.0
    %v704 = vmax.f32 %v640, 0.0
    %v705 = vmax.f32 %v641, 0.0
    %v706 = vmax.f32 %v642, 0.0
    %v707 = vmax.f32 %v643, 0.0
    %v708 = vmax.f32 %v644, 0.0
    %v709 = vmax.f32 %v645, 0.0
    %v710 = vmax.f32 %v646, 0.0
    %v711 = vmax.f32 %v647, 0.0
    %v712 = vmax.f32 %v648, 0.0
    %v713 = vmax.f32 %v649, 0.0
    %v714 = vmax.f32 %v650, 0.0
    %v715 = vmax.f32 %v651, 0.0
    %v716 = vmax.f32 %v652, 0.0
    %v717 = vmax.f32 %v653, 0.0
    %v718 = vmax.f32 %v654, 0.0
    %v719 = vmax.f32 %v655, 0.0
    %v720 = vmax.f32 %v656, 0.0
    %v721 = vmax.f32 %v657, 0.0
    %v722 = vmax.f32 %v658, 0.0
    %v723 = vmax.f32 %v659, 0.0
    %v724 = vmax.f32 %v660, 0.0
    %v725 = vmax.f32 %v661, 0.0
    %v726 = vmax.f32 %v662, 0.0
    %v727 = vmax.f32 %v663, 0.0
    %v728 = vmax.f32 %v664, 0.0
    %v729 = vmax.f32 %v665, 0.0
    %v730 = vmax.f32 %v666, 0.0
    %v731 = vmax.f32 %v667, 0.0
    %v732 = vmax.f32 %v668, 0.0
    %v733 = vmax.f32 %v669, 0.0
    %v734 = vmax.f32 %v670, 0.0
    %v735 = vmax.f32 %v671, 0.0
    %v736 = vmax.f32 %v672, 0.0
    %v737 = vmax.f32 %v673, 0.0
    %v738 = vmax.f32 %v674, 0.0
    %v739 = vmax.f32 %v675, 0.0
    %v740 = vmax.f32 %v676, 0.0
    %v741 = vmax.f32 %v677, 0.0
    %v742 = vmax.f32 %v678, 0.0
    %v743 = vmax.f32 %v679, 0.0
    %v744 = vmax.f32 %v680, 0.0
    %v745 = vmax.f32 %v681, 0.0
    %v746 = vmax.f32 %v682, 0.0
    %v747 = vmax.f32 %v683, 0.0
    %v748 = vmax.f32 %v684, 0.0
    %v749 = vmax.f32 %v685, 0.0
    %814 = vrot.lane.b32.xlu0 %v686, 64
    %v815 = vpop.permute.xlu0 %814
    %816 = vrot.lane.b32.xlu0 %v687, 64
    %v817 = vpop.permute.xlu0 %816
    %818 = vrot.lane.b32.xlu0 %v688, 64
    %v819 = vpop.permute.xlu0 %818
    %820 = vrot.lane.b32.xlu0 %v689, 64
    %v821 = vpop.permute.xlu0 %820
    %822 = vrot.lane.b32.xlu0 %v690, 64
    %v823 = vpop.permute.xlu0 %822
    %824 = vrot.lane.b32.xlu0 %v691, 64
    %v825 = vpop.permute.xlu0 %824
    %826 = vrot.lane.b32.xlu0 %v692, 64
    %v827 = vpop.permute.xlu0 %826
    %828 = vrot.lane.b32.xlu0 %v693, 64
    %v829 = vpop.permute.xlu0 %828
    %830 = vrot.lane.b32.xlu0 %v694, 64
    %v831 = vpop.permute.xlu0 %830
    %832 = vrot.lane.b32.xlu0 %v695, 64
    %v833 = vpop.permute.xlu0 %832
    %834 = vrot.lane.b32.xlu0 %v696, 64
    %v835 = vpop.permute.xlu0 %834
    %836 = vrot.lane.b32.xlu0 %v697, 64
    %v837 = vpop.permute.xlu0 %836
    %838 = vrot.lane.b32.xlu0 %v698, 64
    %v839 = vpop.permute.xlu0 %838
    %840 = vrot.lane.b32.xlu0 %v699, 64
    %v841 = vpop.permute.xlu0 %840
    %842 = vrot.lane.b32.xlu0 %v700, 64
    %v843 = vpop.permute.xlu0 %842
    %844 = vrot.lane.b32.xlu0 %v701, 64
    %v845 = vpop.permute.xlu0 %844
    %846 = vrot.lane.b32.xlu0 %v702, 64
    %v847 = vpop.permute.xlu0 %846
    %848 = vrot.lane.b32.xlu0 %v703, 64
    %v849 = vpop.permute.xlu0 %848
    %850 = vrot.lane.b32.xlu0 %v704, 64
    %v851 = vpop.permute.xlu0 %850
    %852 = vrot.lane.b32.xlu0 %v705, 64
    %v853 = vpop.permute.xlu0 %852
    %854 = vrot.lane.b32.xlu0 %v706, 64
    %v855 = vpop.permute.xlu0 %854
    %856 = vrot.lane.b32.xlu0 %v707, 64
    %v857 = vpop.permute.xlu0 %856
    %858 = vrot.lane.b32.xlu0 %v708, 64
    %v859 = vpop.permute.xlu0 %858
    %860 = vrot.lane.b32.xlu0 %v709, 64
    %v861 = vpop.permute.xlu0 %860
    %862 = vrot.lane.b32.xlu0 %v710, 64
    %v863 = vpop.permute.xlu0 %862
    %864 = vrot.lane.b32.xlu0 %v711, 64
    %v865 = vpop.permute.xlu0 %864
    %866 = vrot.lane.b32.xlu0 %v712, 64
    %v867 = vpop.permute.xlu0 %866
    %868 = vrot.lane.b32.xlu0 %v713, 64
    %v869 = vpop.permute.xlu0 %868
    %870 = vrot.lane.b32.xlu0 %v714, 64
    %v871 = vpop.permute.xlu0 %870
    %872 = vrot.lane.b32.xlu0 %v715, 64
    %v873 = vpop.permute.xlu0 %872
    %874 = vrot.lane.b32.xlu0 %v716, 64
    %v875 = vpop.permute.xlu0 %874
    %876 = vrot.lane.b32.xlu0 %v717, 64
    %v877 = vpop.permute.xlu0 %876
    %878 = vrot.lane.b32.xlu0 %v718, 64
    %v879 = vpop.permute.xlu0 %878
    %880 = vrot.lane.b32.xlu0 %v719, 64
    %v881 = vpop.permute.xlu0 %880
    %882 = vrot.lane.b32.xlu0 %v720, 64
    %v883 = vpop.permute.xlu0 %882
    %884 = vrot.lane.b32.xlu0 %v721, 64
    %v885 = vpop.permute.xlu0 %884
    %886 = vrot.lane.b32.xlu0 %v722, 64
    %v887 = vpop.permute.xlu0 %886
    %888 = vrot.lane.b32.xlu0 %v723, 64
    %v889 = vpop.permute.xlu0 %888
    %890 = vrot.lane.b32.xlu0 %v724, 64
    %v891 = vpop.permute.xlu0 %890
    %892 = vrot.lane.b32.xlu0 %v725, 64
    %v893 = vpop.permute.xlu0 %892
    %894 = vrot.lane.b32.xlu0 %v726, 64
    %v895 = vpop.permute.xlu0 %894
    %896 = vrot.lane.b32.xlu0 %v727, 64
    %v897 = vpop.permute.xlu0 %896
    %898 = vrot.lane.b32.xlu0 %v728, 64
    %v899 = vpop.permute.xlu0 %898
    %900 = vrot.lane.b32.xlu0 %v729, 64
    %v901 = vpop.permute.xlu0 %900
    %902 = vrot.lane.b32.xlu0 %v730, 64
    %v903 = vpop.permute.xlu0 %902
    %904 = vrot.lane.b32.xlu0 %v731, 64
    %v905 = vpop.permute.xlu0 %904
    %906 = vrot.lane.b32.xlu0 %v732, 64
    %v907 = vpop.permute.xlu0 %906
    %908 = vrot.lane.b32.xlu0 %v733, 64
    %v909 = vpop.permute.xlu0 %908
    %910 = vrot.lane.b32.xlu0 %v734, 64
    %v911 = vpop.permute.xlu0 %910
    %912 = vrot.lane.b32.xlu0 %v735, 64
    %v913 = vpop.permute.xlu0 %912
    %914 = vrot.lane.b32.xlu0 %v736, 64
    %v915 = vpop.permute.xlu0 %914
    %916 = vrot.lane.b32.xlu0 %v737, 64
    %v917 = vpop.permute.xlu0 %916
    %918 = vrot.lane.b32.xlu0 %v738, 64
    %v919 = vpop.permute.xlu0 %918
    %920 = vrot.lane.b32.xlu0 %v739, 64
    %v921 = vpop.permute.xlu0 %920
    %922 = vrot.lane.b32.xlu0 %v740, 64
    %v923 = vpop.permute.xlu0 %922
    %924 = vrot.lane.b32.xlu0 %v741, 64
    %v925 = vpop.permute.xlu0 %924
    %926 = vrot.lane.b32.xlu0 %v742, 64
    %v927 = vpop.permute.xlu0 %926
    %928 = vrot.lane.b32.xlu0 %v743, 64
    %v929 = vpop.permute.xlu0 %928
    %930 = vrot.lane.b32.xlu0 %v744, 64
    %v931 = vpop.permute.xlu0 %930
    %932 = vrot.lane.b32.xlu0 %v745, 64
    %v933 = vpop.permute.xlu0 %932
    %934 = vrot.lane.b32.xlu0 %v746, 64
    %v935 = vpop.permute.xlu0 %934
    %936 = vrot.lane.b32.xlu0 %v747, 64
    %v937 = vpop.permute.xlu0 %936
    %938 = vrot.lane.b32.xlu0 %v748, 64
    %v939 = vpop.permute.xlu0 %938
    %940 = vrot.lane.b32.xlu0 %v749, 64
    %v941 = vpop.permute.xlu0 %940
    %v1006 = vadd.f32 %v686, %v815
    %v1007 = vadd.f32 %v687, %v817
    %v1008 = vadd.f32 %v688, %v819
    %v1009 = vadd.f32 %v689, %v821
    %v1010 = vadd.f32 %v690, %v823
    %v1011 = vadd.f32 %v691, %v825
    %v1012 = vadd.f32 %v692, %v827
    %v1013 = vadd.f32 %v693, %v829
    %v1014 = vadd.f32 %v694, %v831
    %v1015 = vadd.f32 %v695, %v833
    %v1016 = vadd.f32 %v696, %v835
    %v1017 = vadd.f32 %v697, %v837
    %v1018 = vadd.f32 %v698, %v839
    %v1019 = vadd.f32 %v699, %v841
    %v1020 = vadd.f32 %v700, %v843
    %v1021 = vadd.f32 %v701, %v845
    %v1022 = vadd.f32 %v702, %v847
    %v1023 = vadd.f32 %v703, %v849
    %v1024 = vadd.f32 %v704, %v851
    %v1025 = vadd.f32 %v705, %v853
    %v1026 = vadd.f32 %v706, %v855
    %v1027 = vadd.f32 %v707, %v857
    %v1028 = vadd.f32 %v708, %v859
    %v1029 = vadd.f32 %v709, %v861
    %v1030 = vadd.f32 %v710, %v863
    %v1031 = vadd.f32 %v711, %v865
    %v1032 = vadd.f32 %v712, %v867
    %v1033 = vadd.f32 %v713, %v869
    %v1034 = vadd.f32 %v714, %v871
    %v1035 = vadd.f32 %v715, %v873
    %v1036 = vadd.f32 %v716, %v875
    %v1037 = vadd.f32 %v717, %v877
    %v1038 = vadd.f32 %v718, %v879
    %v1039 = vadd.f32 %v719, %v881
    %v1040 = vadd.f32 %v720, %v883
    %v1041 = vadd.f32 %v721, %v885
    %v1042 = vadd.f32 %v722, %v887
    %v1043 = vadd.f32 %v723, %v889
    %v1044 = vadd.f32 %v724, %v891
    %v1045 = vadd.f32 %v725, %v893
    %v1046 = vadd.f32 %v726, %v895
    %v1047 = vadd.f32 %v727, %v897
    %v1048 = vadd.f32 %v728, %v899
    %v1049 = vadd.f32 %v729, %v901
    %v1050 = vadd.f32 %v730, %v903
    %v1051 = vadd.f32 %v731, %v905
    %v1052 = vadd.f32 %v732, %v907
    %v1053 = vadd.f32 %v733, %v909
    %v1054 = vadd.f32 %v734, %v911
    %v1055 = vadd.f32 %v735, %v913
    %v1056 = vadd.f32 %v736, %v915
    %v1057 = vadd.f32 %v737, %v917
    %v1058 = vadd.f32 %v738, %v919
    %v1059 = vadd.f32 %v739, %v921
    %v1060 = vadd.f32 %v740, %v923
    %v1061 = vadd.f32 %v741, %v925
    %v1062 = vadd.f32 %v742, %v927
    %v1063 = vadd.f32 %v743, %v929
    %v1064 = vadd.f32 %v744, %v931
    %v1065 = vadd.f32 %v745, %v933
    %v1066 = vadd.f32 %v746, %v935
    %v1067 = vadd.f32 %v747, %v937
    %v1068 = vadd.f32 %v748, %v939
    %v1069 = vadd.f32 %v749, %v941
    %vm1070 = vcmask 523264
    %1071 = vst.msk [vmem:[%s3] sm:$0xff] %vm1070, %v1006
    %1072 = vst.msk [vmem:[%s3 + $0x8] sm:$0xff] %vm1070, %v1007
    %1073 = vst.msk [vmem:[%s3 + $0x10] sm:$0xff] %vm1070, %v1008
    %1074 = vst.msk [vmem:[%s3 + $0x18] sm:$0xff] %vm1070, %v1009
    %1075 = vst.msk [vmem:[%s3 + $0x20] sm:$0xff] %vm1070, %v1010
    %1076 = vst.msk [vmem:[%s3 + $0x28] sm:$0xff] %vm1070, %v1011
    %1077 = vst.msk [vmem:[%s3 + $0x30] sm:$0xff] %vm1070, %v1012
    %1078 = vst.msk [vmem:[%s3 + $0x38] sm:$0xff] %vm1070, %v1013
    %1079 = vst.msk [vmem:[%s3 + $0x40] sm:$0xff] %vm1070, %v1014
    %1080 = vst.msk [vmem:[%s3 + $0x48] sm:$0xff] %vm1070, %v1015
    %1081 = vst.msk [vmem:[%s3 + $0x50] sm:$0xff] %vm1070, %v1016
    %1082 = vst.msk [vmem:[%s3 + $0x58] sm:$0xff] %vm1070, %v1017
    %1083 = vst.msk [vmem:[%s3 + $0x60] sm:$0xff] %vm1070, %v1018
    %1084 = vst.msk [vmem:[%s3 + $0x68] sm:$0xff] %vm1070, %v1019
    %1085 = vst.msk [vmem:[%s3 + $0x70] sm:$0xff] %vm1070, %v1020
    %1086 = vst.msk [vmem:[%s3 + $0x78] sm:$0xff] %vm1070, %v1021
    %1087 = vst.msk [vmem:[%s3 + $0x80] sm:$0xff] %vm1070, %v1022
    %1088 = vst.msk [vmem:[%s3 + $0x88] sm:$0xff] %vm1070, %v1023
    %1089 = vst.msk [vmem:[%s3 + $0x90] sm:$0xff] %vm1070, %v1024
    %1090 = vst.msk [vmem:[%s3 + $0x98] sm:$0xff] %vm1070, %v1025
    %1091 = vst.msk [vmem:[%s3 + $0xa0] sm:$0xff] %vm1070, %v1026
    %1092 = vst.msk [vmem:[%s3 + $0xa8] sm:$0xff] %vm1070, %v1027
    %1093 = vst.msk [vmem:[%s3 + $0xb0] sm:$0xff] %vm1070, %v1028
    %1094 = vst.msk [vmem:[%s3 + $0xb8] sm:$0xff] %vm1070, %v1029
    %1095 = vst.msk [vmem:[%s3 + $0xc0] sm:$0xff] %vm1070, %v1030
    %1096 = vst.msk [vmem:[%s3 + $0xc8] sm:$0xff] %vm1070, %v1031
    %1097 = vst.msk [vmem:[%s3 + $0xd0] sm:$0xff] %vm1070, %v1032
    %1098 = vst.msk [vmem:[%s3 + $0xd8] sm:$0xff] %vm1070, %v1033
    %1099 = vst.msk [vmem:[%s3 + $0xe0] sm:$0xff] %vm1070, %v1034
    %1100 = vst.msk [vmem:[%s3 + $0xe8] sm:$0xff] %vm1070, %v1035
    %1101 = vst.msk [vmem:[%s3 + $0xf0] sm:$0xff] %vm1070, %v1036
    %1102 = vst.msk [vmem:[%s3 + $0xf8] sm:$0xff] %vm1070, %v1037
    %1103 = vst.msk [vmem:[%s3 + $0x100] sm:$0xff] %vm1070, %v1038
    %1104 = vst.msk [vmem:[%s3 + $0x108] sm:$0xff] %vm1070, %v1039
    %1105 = vst.msk [vmem:[%s3 + $0x110] sm:$0xff] %vm1070, %v1040
    %1106 = vst.msk [vmem:[%s3 + $0x118] sm:$0xff] %vm1070, %v1041
    %1107 = vst.msk [vmem:[%s3 + $0x120] sm:$0xff] %vm1070, %v1042
    %1108 = vst.msk [vmem:[%s3 + $0x128] sm:$0xff] %vm1070, %v1043
    %1109 = vst.msk [vmem:[%s3 + $0x130] sm:$0xff] %vm1070, %v1044
    %1110 = vst.msk [vmem:[%s3 + $0x138] sm:$0xff] %vm1070, %v1045
    %1111 = vst.msk [vmem:[%s3 + $0x140] sm:$0xff] %vm1070, %v1046
    %1112 = vst.msk [vmem:[%s3 + $0x148] sm:$0xff] %vm1070, %v1047
    %1113 = vst.msk [vmem:[%s3 + $0x150] sm:$0xff] %vm1070, %v1048
    %1114 = vst.msk [vmem:[%s3 + $0x158] sm:$0xff] %vm1070, %v1049
    %1115 = vst.msk [vmem:[%s3 + $0x160] sm:$0xff] %vm1070, %v1050
    %1116 = vst.msk [vmem:[%s3 + $0x168] sm:$0xff] %vm1070, %v1051
    %1117 = vst.msk [vmem:[%s3 + $0x170] sm:$0xff] %vm1070, %v1052
    %1118 = vst.msk [vmem:[%s3 + $0x178] sm:$0xff] %vm1070, %v1053
    %1119 = vst.msk [vmem:[%s3 + $0x180] sm:$0xff] %vm1070, %v1054
    %1120 = vst.msk [vmem:[%s3 + $0x188] sm:$0xff] %vm1070, %v1055
    %1121 = vst.msk [vmem:[%s3 + $0x190] sm:$0xff] %vm1070, %v1056
    %1122 = vst.msk [vmem:[%s3 + $0x198] sm:$0xff] %vm1070, %v1057
    %1123 = vst.msk [vmem:[%s3 + $0x1a0] sm:$0xff] %vm1070, %v1058
    %1124 = vst.msk [vmem:[%s3 + $0x1a8] sm:$0xff] %vm1070, %v1059
    %1125 = vst.msk [vmem:[%s3 + $0x1b0] sm:$0xff] %vm1070, %v1060
    %1126 = vst.msk [vmem:[%s3 + $0x1b8] sm:$0xff] %vm1070, %v1061
    %1127 = vst.msk [vmem:[%s3 + $0x1c0] sm:$0xff] %vm1070, %v1062
    %1128 = vst.msk [vmem:[%s3 + $0x1c8] sm:$0xff] %vm1070, %v1063
    %1129 = vst.msk [vmem:[%s3 + $0x1d0] sm:$0xff] %vm1070, %v1064
    %1130 = vst.msk [vmem:[%s3 + $0x1d8] sm:$0xff] %vm1070, %v1065
    %1131 = vst.msk [vmem:[%s3 + $0x1e0] sm:$0xff] %vm1070, %v1066
    %1132 = vst.msk [vmem:[%s3 + $0x1e8] sm:$0xff] %vm1070, %v1067
    %1133 = vst.msk [vmem:[%s3 + $0x1f0] sm:$0xff] %vm1070, %v1068
    %1134 = vst.msk [vmem:[%s3 + $0x1f8] sm:$0xff] %vm1070, %v1069
    // Predicated region
    $region26: #{tpu_custom_call.1} parent=1 // pred_check
      _
    $region27: #{tpu_custom_call.1} parent=1 // pred_check_branch
      %1136 = sbr.rel (0) target = $region29
    $region28: #{tpu_custom_call.1} parent=1 // pred_region
      _
    $region29: #{tpu_custom_call.1} parent=1 // pred_fallthru
      _
    // Predicated region
    $region30: #{tpu_custom_call.1} parent=1 // pred_check
      _
    $region31: #{tpu_custom_call.1} parent=1 // pred_check_branch
      %1138 = sbr.rel (0) target = $region33
    $region32: #{tpu_custom_call.1} parent=1 // pred_region
      _
    $region33: #{tpu_custom_call.1} parent=1 // pred_fallthru
      _
    %1139 = vsyncpa [#allocation3], 1
    %1140 = vsyncpa [#allocation5], 1

</llo_original>
